<compile_context>
chip_gen: v7x
topology: tpu7x:2x2x1
jax: 0.10.0
libtpu: 0.0.40
codegen_flags: <defaults>
</compile_context>

<pallas_src>
import functools

import jax
import jax.numpy as jnp
from jax.experimental import pallas as pl
from jax.experimental.pallas import tpu as pltpu


_INV_SQRT2 = 0.7071067811865476
_SQRT_2_OVER_PI = 0.7978845608028654

_MIN_ROWS_PER_STEP = 1024                    # amortize ~0.35 us per grid step
_VMEM_STREAM_BUDGET = 28 * 1024 * 1024       # safe on v5e/v6e (128 MiB) and v7x (64 MiB/TC)


# ----------------------------------------------------------------------------
# Kernels
# ----------------------------------------------------------------------------
def _gelu(h, approximate):
    if approximate:
        # tanh approximation: the transcendental runs on the EUP slot instead
        # of burning VALU slots at low lane occupancy.
        return 0.5 * h * (1.0 + jnp.tanh(_SQRT_2_OVER_PI * (h + 0.044715 * h * h * h)))
    # Exact erf-GELU (matches torch.nn.GELU() default).
    return 0.5 * h * (1.0 + jax.lax.erf(h * _INV_SQRT2))


def _mlp_tail(h, w2_ref, b2_ref, out_ref, approximate):
    h = _gelu(h, approximate)
    o = jnp.dot(h, w2_ref[...], preferred_element_type=jnp.float32)
    out_ref[...] = (o + b2_ref[...]).astype(out_ref.dtype)


def _node_kernel_scalar_t(z_ref, w1z_ref, b1_ref, w2_ref, b2_ref, out_ref,
                          *, approximate):
    """Scalar-t path: t already folded into b1 (b1_eff = b1 + t * w1[0])."""
    h = jnp.dot(z_ref[...], w1z_ref[...], preferred_element_type=jnp.float32)
    h = h + b1_ref[...]
    _mlp_tail(h, w2_ref, b2_ref, out_ref, approximate)


def _node_kernel_vec_t(z_ref, t_ref, w1z_ref, w1t_ref, b1_ref, w2_ref, b2_ref,
                       out_ref, *, approximate):
    """Per-sample-t path: add t_col * w1_row0 as a cheap VPU broadcast."""
    h = jnp.dot(z_ref[...], w1z_ref[...], preferred_element_type=jnp.float32)
    h = h + t_ref[...] * w1t_ref[...] + b1_ref[...]
    _mlp_tail(h, w2_ref, b2_ref, out_ref, approximate)


# ----------------------------------------------------------------------------
# Tile planning
# ----------------------------------------------------------------------------
def _round_up(x, m):
    return -(-x // m) * m


def _choose_bm(batch, max_bm):
    """Batch tile: big, 8-aligned, >= 4 grid steps when the batch allows."""
    if batch <= max_bm and batch <= 4 * _MIN_ROWS_PER_STEP:
        return batch                              # single full-extent block
    # Aim for >= 4 grid steps (>= 2 pipelined steps per TensorCore on v7x)
    # while keeping each step large enough to amortize per-step overhead.
    bm = min(max_bm, max(_MIN_ROWS_PER_STEP, -(-batch // 4)))
    bm = min(_round_up(bm, 8), batch)
    if bm != batch:
        bm = max(8, (bm // 8) * 8)                # must be sublane-aligned
    return bm


def _plan_tiles(batch, z_dim, d_out, has_t_stream, max_bm):
    """Pick the batch tile and a generation-safe VMEM limit.

    Every (bm, feat<128) f32 tile lane-pads to 128 lanes in VMEM (512 B/row
    per buffer) and Pallas double-buffers each stream; the 28 MiB budget stays
    well under v7x's 64 MiB per-TC physical VMEM and v5e/v6e physical VMEM,
    while we raise the scoped limit explicitly (v5e default is only 16 MiB).
    """
    lane = lambda n: _round_up(n, 128)
    per_row = 4 * 2 * (lane(z_dim) + lane(d_out) + (lane(1) if has_t_stream else 0))

    bm = _choose_bm(batch, max_bm)
    bm_cap = max(8, (_VMEM_STREAM_BUDGET // per_row) // 8 * 8)
    if bm > bm_cap:
        bm = bm_cap                                # bm_cap < batch, multiple of 8
    # Weights are tiny (<< 1 MiB); fixed headroom covers them + compiler scratch.
    vmem_limit = int(min(max(per_row * bm + (4 << 20), 16 << 20), 64 << 20))
    return bm, vmem_limit


# ----------------------------------------------------------------------------
# Wrapper
# ----------------------------------------------------------------------------
def prepare_node_params(w1, b1, w2, b2):
    """One-time weight prep (hoisted out of the per-call jitted forward)."""
    hidden = w1.shape[1]
    d_out = w2.shape[1]
    return dict(
        w1_z=jnp.asarray(w1[1:, :], jnp.float32),           # (z_dim, hidden)
        w1_t=jnp.asarray(w1[0:1, :], jnp.float32),          # (1, hidden) time row
        b1=jnp.asarray(b1, jnp.float32).reshape(1, hidden),
        w2=jnp.asarray(w2, jnp.float32),                     # (hidden, d_out)
        b2=jnp.asarray(b2, jnp.float32).reshape(1, d_out),
    )


@functools.partial(jax.jit, static_argnames=("max_block_m", "approximate_gelu"))
def node_func_forward(t, z, params, *, max_block_m=8192, approximate_gelu=False):
    """JAX/Pallas equivalent of node_func_wide_time_variant.forward(t, z).

    t : scalar () or (B,) / (B, 1) float32
    z : (B, zx_dim + zy_dim) float32
    params : output of prepare_node_params(w1, b1, w2, b2)
    """
    B, z_dim = z.shape
    hidden = params["w1_z"].shape[1]
    d_out = params["w2"].shape[1]
    vec_t = (t.ndim != 0)

    bm, vmem_limit = _plan_tiles(B, z_dim, d_out, vec_t, max_block_m)
    grid = (pl.cdiv(B, bm),)
    # Note: when bm does not divide B the last block is partial; rows are
    # independent so the masked out-of-bounds lanes/sublanes are harmless.

    cparams = pltpu.CompilerParams(
        dimension_semantics=("parallel",), vmem_limit_bytes=vmem_limit)

    weight_elems = (z_dim + 2) * hidden + hidden * d_out + d_out
    cost = pl.CostEstimate(
        flops=2 * B * hidden * (z_dim + d_out),
        transcendentals=B * hidden,
        bytes_accessed=int(4 * (B * (z_dim + d_out + (1 if vec_t else 0)) + weight_elems)),
    )

    z_spec = pl.BlockSpec((bm, z_dim), lambda i: (i, 0))
    # Unpadded, lane-masked output: full-extent last dim is legal and the
    # VMEM->HBM writeback only moves d_out*4 bytes per row.
    out_spec = pl.BlockSpec((bm, d_out), lambda i: (i, 0))
    out_shape = jax.ShapeDtypeStruct((B, d_out), z.dtype)

    if not vec_t:
        # Fold the constant time column into the first-layer bias: removes the
        # whole time stream (and the concat) from the kernel.
        b1_eff = params["b1"] + t.astype(jnp.float32) * params["w1_t"]
        in_specs = [
            z_spec,
            pl.BlockSpec((z_dim, hidden), lambda i: (0, 0)),   # W1_z (resident)
            pl.BlockSpec((1, hidden), lambda i: (0, 0)),       # b1_eff
            pl.BlockSpec((hidden, d_out), lambda i: (0, 0)),   # W2
            pl.BlockSpec((1, d_out), lambda i: (0, 0)),        # b2
        ]
        return pl.pallas_call(
            functools.partial(_node_kernel_scalar_t, approximate=approximate_gelu),
            out_shape=out_shape,
            grid_spec=pl.GridSpec(grid=grid, in_specs=in_specs, out_specs=out_spec),
            compiler_params=cparams,
            cost_estimate=cost,
        )(z, params["w1_z"], b1_eff, params["w2"], params["b2"])

    t_col = t.reshape(B, 1).astype(z.dtype)
    in_specs = [
        z_spec,
        pl.BlockSpec((bm, 1), lambda i: (i, 0)),               # t column (tiled)
        pl.BlockSpec((z_dim, hidden), lambda i: (0, 0)),       # W1_z
        pl.BlockSpec((1, hidden), lambda i: (0, 0)),           # W1 time row
        pl.BlockSpec((1, hidden), lambda i: (0, 0)),           # b1
        pl.BlockSpec((hidden, d_out), lambda i: (0, 0)),       # W2
        pl.BlockSpec((1, d_out), lambda i: (0, 0)),            # b2
    ]
    return pl.pallas_call(
        functools.partial(_node_kernel_vec_t, approximate=approximate_gelu),
        out_shape=out_shape,
        grid_spec=pl.GridSpec(grid=grid, in_specs=in_specs, out_specs=out_spec),
        compiler_params=cparams,
        cost_estimate=cost,
    )(z, t_col, params["w1_z"], params["w1_t"], params["b1"], params["w2"], params["b2"])


# ----------------------------------------------------------------------------
# Reference (pure JAX, mirrors the PyTorch module exactly)
# ----------------------------------------------------------------------------
def _reference_forward(t, z, w1, b1, w2, b2):
    B = z.shape[0]
    t_col = jnp.full((B, 1), t, dtype=z.dtype) if t.ndim == 0 else t.reshape(B, 1)
    x = jnp.concatenate([t_col, z], axis=-1)
    h = x @ w1 + b1
    h = 0.5 * h * (1.0 + jax.lax.erf(h * _INV_SQRT2))
    return h @ w2 + b2


if __name__ == "__main__":
    # Module hyper-params (small, consistent with the module's __init__).
    zx_dim, zy_dim, num_hidden = 8, 7, 32
    B = 16
    d_in = zx_dim + zy_dim + 1          # +1 for the time column
    d_out = zx_dim + zy_dim

    key = jax.random.PRNGKey(0)
    k_z, k_w1, k_b1, k_w2, k_b2, k_t, k_z2 = jax.random.split(key, 7)

    # Deterministic synthetic parameters (stand-in for nn.Linear weights).
    w1 = (jax.random.normal(k_w1, (d_in, num_hidden), jnp.float32)
          * (1.0 / jnp.sqrt(d_in)))
    b1 = jax.random.normal(k_b1, (num_hidden,), jnp.float32) * 0.01
    w2 = (jax.random.normal(k_w2, (num_hidden, d_out), jnp.float32)
          * (1.0 / jnp.sqrt(num_hidden)))
    b2 = jax.random.normal(k_b2, (d_out,), jnp.float32) * 0.01

    params = prepare_node_params(w1, b1, w2, b2)   # one-time weight prep
    z = jax.random.normal(k_z, (B, zx_dim + zy_dim), jnp.float32)

    # Path 1: scalar t (torch.full_like broadcast semantics).
    t_scalar = jnp.float32(0.37)
    out_s = jax.block_until_ready(node_func_forward(t_scalar, z, params))
    ref_s = _reference_forward(t_scalar, z, w1, b1, w2, b2)
    assert out_s.shape == (B, d_out)
    assert jnp.allclose(out_s, ref_s, rtol=2e-3, atol=2e-3), "scalar-t mismatch"

    # Path 2: per-sample (B, 1) t.
    t_vec = jax.random.uniform(k_t, (B, 1), jnp.float32)
    out_v = jax.block_until_ready(node_func_forward(t_vec, z, params))
    ref_v = _reference_forward(t_vec, z, w1, b1, w2, b2)
    assert out_v.shape == (B, d_out)
    assert jnp.allclose(out_v, ref_v, rtol=2e-3, atol=2e-3), "vector-t mismatch"

    # Path 3: multi-step grid with a partial tail block (exercises tiling/masking).
    B3 = 4104
    z3 = jax.random.normal(k_z2, (B3, zx_dim + zy_dim), jnp.float32)
    out_t = jax.block_until_ready(node_func_forward(t_scalar, z3, params))
    ref_t = _reference_forward(t_scalar, z3, w1, b1, w2, b2)
    assert out_t.shape == (B3, d_out)
    assert jnp.allclose(out_t, ref_t, rtol=2e-3, atol=2e-3), "tiled-grid mismatch"

    print("KERNEL_OK")
</pallas_src>

<mosaic_0001>
module attributes {stable_mosaic.version = 11 : i64} {
  func.func @_node_kernel_scalar_t(%arg0: i32, %arg1: memref<16x15xf32, #tpu.memory_space<vmem>>, %arg2: memref<15x32xf32, #tpu.memory_space<vmem>>, %arg3: memref<1x32xf32, #tpu.memory_space<vmem>>, %arg4: memref<32x15xf32, #tpu.memory_space<vmem>>, %arg5: memref<1x15xf32, #tpu.memory_space<vmem>>, %arg6: memref<16x15xf32, #tpu.memory_space<vmem>>) attributes {dimension_semantics = [#tpu.dimension_semantics<parallel>], iteration_bounds = array<i64: 1>, scalar_prefetch = 0 : i64, scratch_operands = 0 : i64, tpu.core_type = #tpu.core_type<tc>, window_params = [{transform_indices = @transform_0, window_bounds = array<i64: 16, 15>}, {pipeline_mode = #tpu.pipeline_mode<synchronous>, transform_indices = @transform_1, window_bounds = array<i64: 15, 32>}, {pipeline_mode = #tpu.pipeline_mode<synchronous>, transform_indices = @transform_2, window_bounds = array<i64: 1, 32>}, {pipeline_mode = #tpu.pipeline_mode<synchronous>, transform_indices = @transform_3, window_bounds = array<i64: 32, 15>}, {pipeline_mode = #tpu.pipeline_mode<synchronous>, transform_indices = @transform_4, window_bounds = array<i64: 1, 15>}, {transform_indices = @transform_5, window_bounds = array<i64: 16, 15>}]} {
    %c0 = arith.constant 0 : index
    %c0_0 = arith.constant 0 : index
    %0 = vector.load %arg1[%c0, %c0_0] : memref<16x15xf32, #tpu.memory_space<vmem>>, vector<16x15xf32>
    %c0_1 = arith.constant 0 : index
    %c0_2 = arith.constant 0 : index
    %1 = vector.load %arg2[%c0_1, %c0_2] : memref<15x32xf32, #tpu.memory_space<vmem>>, vector<15x32xf32>
    %cst = arith.constant dense<0.000000e+00> : vector<16x32xf32>
    %2 = tpu.matmul %0, %1, %cst {dimension_numbers = #tpu.dot_dimension_numbers<[1], [0], [0], [1], [0, 0, 1, 1], [], []>} : vector<16x15xf32>, vector<15x32xf32>, vector<16x32xf32> -> vector<16x32xf32>
    %c0_3 = arith.constant 0 : index
    %c0_4 = arith.constant 0 : index
    %3 = vector.load %arg3[%c0_3, %c0_4] : memref<1x32xf32, #tpu.memory_space<vmem>>, vector<1x32xf32>
    %4 = vector.broadcast %3 : vector<1x32xf32> to vector<16x32xf32>
    %5 = arith.addf %2, %4 : vector<16x32xf32>
    %cst_5 = arith.constant 5.000000e-01 : f32
    %6 = vector.broadcast %cst_5 : f32 to vector<16x32xf32>
    %7 = arith.mulf %6, %5 : vector<16x32xf32>
    %cst_6 = arith.constant 0.707106769 : f32
    %8 = vector.broadcast %cst_6 : f32 to vector<16x32xf32>
    %9 = arith.mulf %5, %8 : vector<16x32xf32>
    %10 = math.erf %9 : vector<16x32xf32>
    %cst_7 = arith.constant 1.000000e+00 : f32
    %11 = vector.broadcast %cst_7 : f32 to vector<16x32xf32>
    %12 = arith.addf %11, %10 : vector<16x32xf32>
    %13 = arith.mulf %7, %12 : vector<16x32xf32>
    %c0_8 = arith.constant 0 : index
    %c0_9 = arith.constant 0 : index
    %14 = vector.load %arg4[%c0_8, %c0_9] : memref<32x15xf32, #tpu.memory_space<vmem>>, vector<32x15xf32>
    %cst_10 = arith.constant dense<0.000000e+00> : vector<16x15xf32>
    %15 = tpu.matmul %13, %14, %cst_10 {dimension_numbers = #tpu.dot_dimension_numbers<[1], [0], [0], [1], [0, 0, 1, 1], [], []>} : vector<16x32xf32>, vector<32x15xf32>, vector<16x15xf32> -> vector<16x15xf32>
    %c0_11 = arith.constant 0 : index
    %c0_12 = arith.constant 0 : index
    %16 = vector.load %arg5[%c0_11, %c0_12] : memref<1x15xf32, #tpu.memory_space<vmem>>, vector<1x15xf32>
    %17 = vector.broadcast %16 : vector<1x15xf32> to vector<16x15xf32>
    %18 = arith.addf %15, %17 : vector<16x15xf32>
    %c0_13 = arith.constant 0 : index
    %c0_14 = arith.constant 0 : index
    %19 = vector.load %arg6[%c0_13, %c0_14] : memref<16x15xf32, #tpu.memory_space<vmem>>, vector<16x15xf32>
    tpu.vector_store %arg6[%c0_13, %c0_14], %18 {strides = array<i32>} : memref<16x15xf32, #tpu.memory_space<vmem>>, vector<16x15xf32>,
    return
  }
  func.func @transform_0(%arg0: i32) -> (i32, i32) {
    %c0_i32 = arith.constant 0 : i32
    %c0_i32_0 = arith.constant 0 : i32
    return %arg0, %c0_i32 : i32, i32
  }
  func.func @transform_1(%arg0: i32) -> (i32, i32) {
    %c0_i32 = arith.constant 0 : i32
    %c0_i32_0 = arith.constant 0 : i32
    %c0_i32_1 = arith.constant 0 : i32
    return %c0_i32, %c0_i32_0 : i32, i32
  }
  func.func @transform_2(%arg0: i32) -> (i32, i32) {
    %c0_i32 = arith.constant 0 : i32
    %c0_i32_0 = arith.constant 0 : i32
    %c0_i32_1 = arith.constant 0 : i32
    return %c0_i32, %c0_i32_0 : i32, i32
  }
  func.func @transform_3(%arg0: i32) -> (i32, i32) {
    %c0_i32 = arith.constant 0 : i32
    %c0_i32_0 = arith.constant 0 : i32
    %c0_i32_1 = arith.constant 0 : i32
    return %c0_i32, %c0_i32_0 : i32, i32
  }
  func.func @transform_4(%arg0: i32) -> (i32, i32) {
    %c0_i32 = arith.constant 0 : i32
    %c0_i32_0 = arith.constant 0 : i32
    %c0_i32_1 = arith.constant 0 : i32
    return %c0_i32, %c0_i32_0 : i32, i32
  }
  func.func @transform_5(%arg0: i32) -> (i32, i32) {
    %c0_i32 = arith.constant 0 : i32
    %c0_i32_0 = arith.constant 0 : i32
    return %arg0, %c0_i32 : i32, i32
  }
}

</mosaic_0001>

<llo_original>
// kernel: node_func_forward.1
$region0: #{node_func_forward.1}
  #allocation0 [shape = 'u32[]', space=smem, size = 0x4, offset = 0x4, fixed_abs, tag = 'smem constant byte address 0x4 - core index']
  #allocation1 [shape = 'u32[144,128]{1,0:T(1,128)}', space=vmem, size = 0x12000, scoped, tag = 'internal scratch']
  %s0 = inlined_call_operand.vmem [shape: f32[16,15], index: 0, kind: input, shape index: {}]
  %s1 = inlined_call_operand.vmem [shape: f32[15,32], index: 1, kind: input, shape index: {}]
  %s2 = inlined_call_operand.vmem [shape: f32[1,32], index: 2, kind: input, shape index: {}]
  %s3 = inlined_call_operand.vmem [shape: f32[32,15], index: 3, kind: input, shape index: {}]
  %s4 = inlined_call_operand.vmem [shape: f32[1,15], index: 4, kind: input, shape index: {}]
  %s5 = inlined_call_operand.hbm [shape: f32[16,15], index: 5, kind: output, shape index: {}]
  %s6 = sld [smem:[#allocation0]]
  $region30: #{node_func_forward.1} parent=0
    _
  %s8 = ssub.s32 1, %s6
  %s9 = scalar_select 0, %s8, %s6
  $region1: #{node_func_forward.1} parent=0
    #allocation2 [shape = 'u8[8192]{0}', space=vmem, size = 0x2000, scoped, tag = 'output window, operand 0, single buffered']
    #allocation3 [shape = 's32[1]{0}', space=sflag, size = 0x4, scoped, tag = 'scoped memory for node_func_forward.1']
    %10 = vsyncpa [#allocation3], 0
    // Predicated region
    $region2: #{node_func_forward.1} parent=1 // pred_check
      _
    $region3: #{node_func_forward.1} parent=1 // pred_check_branch
      %12 = sbr.rel (0) target = $region5
    $region4: #{node_func_forward.1} parent=1 // pred_region
      _
    $region5: #{node_func_forward.1} parent=1 // pred_fallthru
      _
    // Predicated region
    $region6: #{node_func_forward.1} parent=1 // pred_check
      _
    $region7: #{node_func_forward.1} parent=1 // pred_check_branch
      %14 = sbr.rel (0) target = $region9
    $region8: #{node_func_forward.1} parent=1 // pred_region
      _
    $region9: #{node_func_forward.1} parent=1 // pred_fallthru
      _
    // Predicated region
    $region10: #{node_func_forward.1} parent=1 // pred_check
      _
    $region11: #{node_func_forward.1} parent=1 // pred_check_branch
      %16 = sbr.rel (0) target = $region13
    $region12: #{node_func_forward.1} parent=1 // pred_region
      _
    $region13: #{node_func_forward.1} parent=1 // pred_fallthru
      _
    // Predicated region
    $region14: #{node_func_forward.1} parent=1 // pred_check
      _
    $region15: #{node_func_forward.1} parent=1 // pred_check_branch
      %18 = sbr.rel (0) target = $region17
    $region16: #{node_func_forward.1} parent=1 // pred_region
      _
    $region17: #{node_func_forward.1} parent=1 // pred_fallthru
      _
    // Predicated region
    $region18: #{node_func_forward.1} parent=1 // pred_check
      _
    $region19: #{node_func_forward.1} parent=1 // pred_check_branch
      %20 = sbr.rel (0) target = $region21
    $region20: #{node_func_forward.1} parent=1 // pred_region
      _
    $region21: #{node_func_forward.1} parent=1 // pred_fallthru
      _
    %v21 = vld [vmem:[%s0] sm:$0xff]
    %v22 = vld [vmem:[%s0 + $0x8] sm:$0xff]
    %v23 = vld [vmem:[%s1] sm:$0xff]
    %v24 = vld [vmem:[%s1 + $0x8] sm:$0x7f]
    %v25 = vld [vmem:[%s2] sm:$0x1]
    %v27 = vlaneseq
    %v28 = vshrl.u32 %v27, 7
    %v29 = vsub.s32 0, %v28
    %v30 = vrot.slane %v25, %v29
    %vm32 = vcmask 121856
    %v34 = vsel %vm32, %v21, 0
    %v37 = vsel %vm32, %v22, 0
    %vm39 = vcmask 1046528
    %v41 = vsel %vm39, %v24, 0
    %43 = vmatprep.subr.mxu0 0.0
    %44 = vmatpush1.msra.mxu0 %v23
    %45 = vmatprep.subr.mxu0 0.0
    %46 = vmatpush1.msra.mxu0 %v41
    %47 = vmatprep.subr.mxu0 0.0
    %48 = vmatpush1.msra.mxu0 0.0
    %49 = vmatprep.subr.mxu0 0.0
    %50 = vmatpush1.msra.mxu0 0.0
    %51 = vmatprep.subr.mxu0 0.0
    %52 = vmatpush1.msra.mxu0 0.0
    %53 = vmatprep.subr.mxu0 0.0
    %54 = vmatpush1.msra.mxu0 0.0
    %55 = vmatprep.subr.mxu0 0.0
    %56 = vmatpush1.msra.mxu0 0.0
    %57 = vmatprep.subr.mxu0 0.0
    %58 = vmatpush1.msra.mxu0 0.0
    %59 = vmatprep.subr.mxu0 0.0
    %60 = vmatpush1.msra.mxu0 0.0
    %61 = vmatprep.subr.mxu0 0.0
    %62 = vmatpush1.msra.mxu0 0.0
    %63 = vmatprep.subr.mxu0 0.0
    %64 = vmatpush1.msra.mxu0 0.0
    %65 = vmatprep.subr.mxu0 0.0
    %66 = vmatpush1.msra.mxu0 0.0
    %67 = vmatprep.subr.mxu0 0.0
    %68 = vmatpush1.msra.mxu0 0.0
    %69 = vmatprep.subr.mxu0 0.0
    %70 = vmatpush1.msra.mxu0 0.0
    %71 = vmatprep.subr.mxu0 0.0
    %72 = vmatpush1.msra.mxu0 0.0
    %73 = vmatprep.subr.mxu0 0.0
    %74 = vmatpush1.msra.mxu0 0.0
    %75 = vmatprep.subr.mxu0 0.0
    %76 = vmatpush1.msra.mxu0 0.0
    %77 = vmatprep.subr.mxu0 0.0
    %78 = vmatpush1.msra.mxu0 0.0
    %79 = vmatprep.subr.mxu0 0.0
    %80 = vmatpush1.msra.mxu0 0.0
    %81 = vmatprep.subr.mxu0 0.0
    %82 = vmatpush1.msra.mxu0 0.0
    %83 = vmatprep.subr.mxu0 0.0
    %84 = vmatpush1.msra.mxu0 0.0
    %85 = vmatprep.subr.mxu0 0.0
    %86 = vmatpush1.msra.mxu0 0.0
    %87 = vmatprep.subr.mxu0 0.0
    %88 = vmatpush1.msra.mxu0 0.0
    %89 = vmatprep.subr.mxu0 0.0
    %90 = vmatpush1.msra.mxu0 0.0
    %91 = vmatprep.subr.mxu0 0.0
    %92 = vmatpush1.msra.mxu0 0.0
    %93 = vmatprep.subr.mxu0 0.0
    %94 = vmatpush1.msra.mxu0 0.0
    %95 = vmatprep.subr.mxu0 0.0
    %96 = vmatpush1.msra.mxu0 0.0
    %97 = vmatprep.subr.mxu0 0.0
    %98 = vmatpush1.msra.mxu0 0.0
    %99 = vmatprep.subr.mxu0 0.0
    %100 = vmatpush1.msra.mxu0 0.0
    %101 = vmatprep.subr.mxu0 0.0
    %102 = vmatpush1.msra.mxu0 0.0
    %103 = vmatprep.subr.mxu0 0.0
    %104 = vmatpush1.msra.mxu0 0.0
    %105 = vmatprep.subr.mxu0 0.0
    %106 = vmatpush1.msra.mxu0 0.0
    %107 = vmatprep.mubr.f32.mxu0 0.0
    %108 = vmatmul.mubr.f32.gmra.mrb[0].mxu0 %v34
    %v109 = vpop.f32.mrb[0].mxu0
    %v110 = vadd.f32 %v30, %v109
    %v111 = vpop.f32.mrb[0].mxu0
    %112 = vmatprep.mubr.f32.mxu0 0.0
    %113 = vmatmul.mubr.f32.gmra.mrb[0].mxu0 %v37
    %v114 = vpop.f32.mrb[0].mxu0
    %v115 = vadd.f32 %v30, %v114
    %v116 = vpop.f32.mrb[0].mxu0
    %117 = vdwg.mxu0
    %v118 = vmul.f32 %v110, 0.5
    %v119 = vmul.f32 %v115, 0.5
    %v120 = vmul.f32 %v110, 0.70710677
    %v121 = vmul.f32 %v115, 0.70710677
    %v122 = verf.f32.pop %v120
    %v123 = verf.f32.pop %v121
    %v124 = vadd.f32 %v122, 1.0
    %v125 = vadd.f32 %v123, 1.0
    %v126 = vmul.f32 %v118, %v124
    %v127 = vmul.f32 %v119, %v125
    %v128 = vld [vmem:[%s3] sm:$0xff]
    %v129 = vld [vmem:[%s3 + $0x8] sm:$0xff]
    %v130 = vld [vmem:[%s3 + $0x10] sm:$0xff]
    %v131 = vld [vmem:[%s3 + $0x18] sm:$0xff]
    %v132 = vld [vmem:[%s4] sm:$0x1]
    %v134 = vlaneseq
    %v135 = vshrl.u32 %v134, 7
    %v136 = vsub.s32 0, %v135
    %v137 = vrot.slane %v132, %v136
    %vm139 = vcmask 261120
    %v141 = vsel %vm139, %v126, 0
    %v144 = vsel %vm139, %v127, 0
    %146 = vmatprep.subr.mxu0 0.0
    %147 = vmatpush1.msra.mxu0 %v128
    %148 = vmatprep.subr.mxu0 0.0
    %149 = vmatpush1.msra.mxu0 %v129
    %150 = vmatprep.subr.mxu0 0.0
    %151 = vmatpush1.msra.mxu0 %v130
    %152 = vmatprep.subr.mxu0 0.0
    %153 = vmatpush1.msra.mxu0 %v131
    %154 = vmatprep.subr.mxu0 0.0
    %155 = vmatpush1.msra.mxu0 0.0
    %156 = vmatprep.subr.mxu0 0.0
    %157 = vmatpush1.msra.mxu0 0.0
    %158 = vmatprep.subr.mxu0 0.0
    %159 = vmatpush1.msra.mxu0 0.0
    %160 = vmatprep.subr.mxu0 0.0
    %161 = vmatpush1.msra.mxu0 0.0
    %162 = vmatprep.subr.mxu0 0.0
    %163 = vmatpush1.msra.mxu0 0.0
    %164 = vmatprep.subr.mxu0 0.0
    %165 = vmatpush1.msra.mxu0 0.0
    %166 = vmatprep.subr.mxu0 0.0
    %167 = vmatpush1.msra.mxu0 0.0
    %168 = vmatprep.subr.mxu0 0.0
    %169 = vmatpush1.msra.mxu0 0.0
    %170 = vmatprep.subr.mxu0 0.0
    %171 = vmatpush1.msra.mxu0 0.0
    %172 = vmatprep.subr.mxu0 0.0
    %173 = vmatpush1.msra.mxu0 0.0
    %174 = vmatprep.subr.mxu0 0.0
    %175 = vmatpush1.msra.mxu0 0.0
    %176 = vmatprep.subr.mxu0 0.0
    %177 = vmatpush1.msra.mxu0 0.0
    %178 = vmatprep.subr.mxu0 0.0
    %179 = vmatpush1.msra.mxu0 0.0
    %180 = vmatprep.subr.mxu0 0.0
    %181 = vmatpush1.msra.mxu0 0.0
    %182 = vmatprep.subr.mxu0 0.0
    %183 = vmatpush1.msra.mxu0 0.0
    %184 = vmatprep.subr.mxu0 0.0
    %185 = vmatpush1.msra.mxu0 0.0
    %186 = vmatprep.subr.mxu0 0.0
    %187 = vmatpush1.msra.mxu0 0.0
    %188 = vmatprep.subr.mxu0 0.0
    %189 = vmatpush1.msra.mxu0 0.0
    %190 = vmatprep.subr.mxu0 0.0
    %191 = vmatpush1.msra.mxu0 0.0
    %192 = vmatprep.subr.mxu0 0.0
    %193 = vmatpush1.msra.mxu0 0.0
    %194 = vmatprep.subr.mxu0 0.0
    %195 = vmatpush1.msra.mxu0 0.0
    %196 = vmatprep.subr.mxu0 0.0
    %197 = vmatpush1.msra.mxu0 0.0
    %198 = vmatprep.subr.mxu0 0.0
    %199 = vmatpush1.msra.mxu0 0.0
    %200 = vmatprep.subr.mxu0 0.0
    %201 = vmatpush1.msra.mxu0 0.0
    %202 = vmatprep.subr.mxu0 0.0
    %203 = vmatpush1.msra.mxu0 0.0
    %204 = vmatprep.subr.mxu0 0.0
    %205 = vmatpush1.msra.mxu0 0.0
    %206 = vmatprep.subr.mxu0 0.0
    %207 = vmatpush1.msra.mxu0 0.0
    %208 = vmatprep.subr.mxu0 0.0
    %209 = vmatpush1.msra.mxu0 0.0
    %210 = vmatprep.mubr.f32.mxu0 0.0
    %211 = vmatmul.mubr.f32.gmra.mrb[0].mxu0 %v141
    %v212 = vpop.f32.mrb[0].mxu0
    %v213 = vadd.f32 %v137, %v212
    %v214 = vpop.f32.mrb[0].mxu0
    %215 = vmatprep.mubr.f32.mxu0 0.0
    %216 = vmatmul.mubr.f32.gmra.mrb[0].mxu0 %v144
    %v217 = vpop.f32.mrb[0].mxu0
    %v218 = vadd.f32 %v137, %v217
    %v219 = vpop.f32.mrb[0].mxu0
    %220 = vdwg.mxu0
    %221 = vst.msk [vmem:[#allocation2] sm:$0xff] %vm32, %v213
    %222 = vst.msk [vmem:[#allocation2 + $0x8] sm:$0xff] %vm32, %v218
    // Predicated region
    $region22: #{node_func_forward.1} parent=1 // pred_check
      _
    $region23: #{node_func_forward.1} parent=1 // pred_check_branch
      %224 = sbr.rel (0) target = $region25
    $region24: #{node_func_forward.1} parent=1 // pred_region
      %s226 = ssub.s32 256, 256
      %227 = vsyncadd [#allocation3], %s226
      %s228 = sshll.u32 [#allocation2], 4
      %s229 = int_to_ptr.vmem [resolvable:$true] %s228
      %234 = dma.vmem_to_hbm [thread:$0]  %s229, 256, %s5, [#allocation3], 128, 128, 8
    $region25: #{node_func_forward.1} parent=1 // pred_fallthru
      _
    // Predicated region
    $region26: #{node_func_forward.1} parent=1 // pred_check
      _
    $region27: #{node_func_forward.1} parent=1 // pred_check_branch
      %236 = sbr.rel (0) target = $region29
    $region28: #{node_func_forward.1} parent=1 // pred_region
      %237 = dma.done [#allocation3], 256
    $region29: #{node_func_forward.1} parent=1 // pred_fallthru
      _
    %238 = vsyncpa [#allocation3], 1

</llo_original>
